<compile_context>
chip_gen: v6e
topology: v6e:2x2x1
jax: 0.10.0
libtpu: 0.0.40
codegen_flags: <defaults>
</compile_context>

<pallas_src>
from functools import partial

import jax
import jax.numpy as jnp
from jax.experimental import pallas as pl
from jax.experimental.pallas import tpu as pltpu

_LANES = 128  # minimal lane-dense last dim (unmasked vst)


def _cdiv(a, b):
    return -(-a // b)


def _round_up(a, b):
    return _cdiv(a, b) * b


def _vmem_budget():
    """Best-effort generation-aware VMEM budget (falls back to v7x-safe defaults)."""
    vmem_cap = 64 * 1024 * 1024  # v7x per-TC physical VMEM (smallest across v5e/v6e/v7x)
    try:
        info = pltpu.get_tpu_info()
        vmem_cap = int(getattr(info, "vmem_capacity_bytes", vmem_cap))
    except Exception:
        pass
    vmem_limit = min(vmem_cap * 3 // 4, 64 * 1024 * 1024)  # 48 MiB on v7x, 64 MiB on v5e/v6e
    pipeline_budget = vmem_limit * 2 // 3                   # headroom for Mosaic scratch
    return pipeline_budget, vmem_limit


def _choose_tile_rows(rows, row_bytes, sublane, per_buf_bytes):
    """Row-tile size: multiple of sublane packing, <= per-buffer byte target,
    and >= 2 tiles (even count when possible) so both v7x TensorCores stream."""
    if rows < 2 * sublane:
        return rows  # tiny slab: single full-extent block (legal per the (8,128) rule)
    cap = max(sublane, (per_buf_bytes // max(row_bytes, 1)) // sublane * sublane)
    num = max(2, _cdiv(rows, cap))
    if num % 2:
        num += 1  # even tile count balances the two v7x TensorCores (best effort)
    return max(sublane, _round_up(_cdiv(rows, num), sublane))


def _rezero_kernel(fn, g_ref, x_ref, o_ref):
    # g_ref: (1,) scalar in SMEM; x_ref/o_ref: (tile_r, cols) VMEM tiles.
    g = g_ref[0]                                   # hoist scalar once per tile
    y = fn(x_ref[...].astype(jnp.float32))         # f32 compute (needed on v5e; hidden by HBM)
    o_ref[...] = (y * g).astype(o_ref.dtype)


def _rezero_residual_kernel(fn, g_ref, x_ref, r_ref, o_ref):
    # Fused ReZero block: o = residual + g * fn(x) in one streaming pass.
    g = g_ref[0]
    y = fn(x_ref[...].astype(jnp.float32))
    o_ref[...] = (r_ref[...].astype(jnp.float32) + y * g).astype(o_ref.dtype)


def rezero(x, g, fn=lambda v: v, residual=None):
    """ReZero forward: fn(x) * g.  If `residual` is given, computes residual + fn(x) * g
    in the same kernel (saves a full elementwise HBM pass at typical call sites).

    `fn` must be strictly elementwise (the wrapper flattens and re-tiles x arbitrarily).
    """
    if not jnp.issubdtype(x.dtype, jnp.floating):
        raise TypeError("rezero kernel supports floating dtypes only "
                        "(integer cast would silently truncate).")
    if residual is not None and residual.shape != x.shape:
        raise ValueError("residual must have the same shape as x")

    orig_shape = x.shape
    out_dtype = x.dtype
    n = int(x.size)
    itemsize = jnp.dtype(out_dtype).itemsize
    sublane = max(8, 32 // itemsize)  # 8 f32 / 16 bf16 sublane packing

    streams = 2 if residual is None else 3  # x (+ residual) + output, each double-buffered
    pipeline_budget, vmem_limit = _vmem_budget()
    per_buf_bytes = max(64 * 1024, pipeline_budget // (2 * streams))

    # ---- lane-dense 2-D layout (zero-copy whenever x.size % 128 == 0) ----
    last = orig_shape[-1] if len(orig_shape) else 1
    if n % _LANES == 0:
        if (len(orig_shape) >= 2 and last % _LANES == 0
                and last * itemsize * sublane <= per_buf_bytes):
            cols = last            # keep D as a wide lane-dense axis (fully zero-copy)
        else:
            cols = _LANES          # flatten to (n/128, 128) -- still a free reshape
        rows, pad = n // cols, 0
    else:
        cols = _LANES              # ragged size: pad only to the next multiple of 128
        rows = _cdiv(n, _LANES)
        pad = rows * _LANES - n

    def to_slab(a):
        a = a.reshape(-1)
        if pad:
            a = jnp.pad(a, (0, pad))   # only materializes a copy for ragged sizes
        return a.reshape(rows, cols)

    x2 = to_slab(x)
    tile_r = _choose_tile_rows(rows, cols * itemsize, sublane, per_buf_bytes)
    grid = (pl.cdiv(rows, tile_r),)    # ragged edge row-block handled by Pallas

    g = jnp.asarray(g, dtype=jnp.float32).reshape(1)
    spec = pl.BlockSpec((tile_r, cols), lambda i: (i, 0))

    if residual is None:
        kernel = partial(_rezero_kernel, fn)
        in_specs = [pl.BlockSpec(memory_space=pltpu.SMEM), spec]
        operands = (g, x2)
    else:
        kernel = partial(_rezero_residual_kernel, fn)
        in_specs = [pl.BlockSpec(memory_space=pltpu.SMEM), spec, spec]
        operands = (g, x2, to_slab(residual))

    out2 = pl.pallas_call(
        kernel,
        out_shape=jax.ShapeDtypeStruct((rows, cols), out_dtype),
        grid=grid,
        in_specs=in_specs,
        out_specs=spec,
        compiler_params=pltpu.CompilerParams(
            dimension_semantics=("parallel",),   # independent tiles -> v7x 2-TC sharding
            vmem_limit_bytes=int(vmem_limit),
        ),
    )(*operands)

    out = out2.reshape(-1)
    if pad:
        out = out[:n]
    return out.reshape(orig_shape)


if __name__ == "__main__":
    key = jax.random.PRNGKey(0)
    fn = jnp.tanh  # example wrapped fn (elementwise), fused into the kernel

    # 1) Module-sized input; g = 0 exactly as nn.Parameter(torch.zeros(1)), then g != 0.
    B, S, D = 2, 8, 32
    x = jax.random.normal(key, (B, S, D), dtype=jnp.float32)
    g0 = jnp.zeros((1,), dtype=jnp.float32)
    out = jax.block_until_ready(rezero(x, g0, fn=fn))
    assert out.shape == x.shape and out.dtype == x.dtype
    assert jnp.allclose(out, fn(x) * g0, atol=1e-6), "mismatch (g=0)"

    g1 = jnp.full((1,), 0.37, dtype=jnp.float32)
    out = jax.block_until_ready(rezero(x, g1, fn=fn))
    assert jnp.allclose(out, fn(x) * g1, atol=1e-5), "mismatch (g!=0)"

    # 2) Zero-copy fast path (last dim % 128 == 0) + >=2-tile grid for dual-TC.
    xw = jax.random.normal(jax.random.PRNGKey(1), (2, 16, 256), dtype=jnp.float32)
    outw = jax.block_until_ready(rezero(xw, g1, fn=fn))
    assert jnp.allclose(outw, fn(xw) * g1, atol=1e-5), "mismatch (wide lane fast path)"

    # 3) Ragged shape: minimal 128-pad + multi-tile grid + partial edge tile.
    xr = jax.random.normal(jax.random.PRNGKey(2), (4, 1111, 257), dtype=jnp.float32)
    outr = jax.block_until_ready(rezero(xr, g1, fn=fn))
    assert outr.shape == xr.shape and outr.dtype == xr.dtype
    assert jnp.allclose(outr, fn(xr) * g1, atol=1e-5), "mismatch (ragged)"

    # 4) bf16 path (f32 compute in-kernel, bf16 store).
    xb = jax.random.normal(jax.random.PRNGKey(3), (2, 8, 64), dtype=jnp.bfloat16)
    outb = jax.block_until_ready(rezero(xb, g1, fn=fn))
    refb = (fn(xb.astype(jnp.float32)) * g1).astype(jnp.bfloat16)
    assert outb.dtype == jnp.bfloat16
    assert jnp.allclose(outb.astype(jnp.float32), refb.astype(jnp.float32), atol=2e-2)

    # 5) Fused residual: y = x + g * fn(x) in a single streaming pass.
    outres = jax.block_until_ready(rezero(x, g1, fn=fn, residual=x))
    assert jnp.allclose(outres, x + fn(x) * g1, atol=1e-5), "mismatch (fused residual)"

    print("KERNEL_OK")
</pallas_src>

<mosaic_0001>
module attributes {stable_mosaic.version = 11 : i64} {
  func.func @_rezero_kernel(%arg0: i32, %arg1: memref<1xf32, #tpu.memory_space<smem>>, %arg2: memref<4x128xf32, #tpu.memory_space<vmem>>, %arg3: memref<4x128xf32, #tpu.memory_space<vmem>>) attributes {dimension_semantics = [#tpu.dimension_semantics<parallel>], iteration_bounds = array<i64: 1>, scalar_prefetch = 0 : i64, scratch_operands = 0 : i64, tpu.core_type = #tpu.core_type<tc>, window_params = [{transform_indices = @transform_0, window_bounds = array<i64: 1>}, {transform_indices = @transform_1, window_bounds = array<i64: 4, 128>}, {transform_indices = @transform_2, window_bounds = array<i64: 4, 128>}]} {
    %c0 = arith.constant 0 : index
    %0 = memref.load %arg1[%c0] : memref<1xf32, #tpu.memory_space<smem>>
    %c0_0 = arith.constant 0 : index
    %c0_1 = arith.constant 0 : index
    %1 = vector.load %arg2[%c0_0, %c0_1] : memref<4x128xf32, #tpu.memory_space<vmem>>, vector<4x128xf32>
    %2 = math.tanh %1 : vector<4x128xf32>
    %3 = vector.broadcast %0 : f32 to vector<4x128xf32>
    %4 = arith.mulf %2, %3 : vector<4x128xf32>
    %c0_2 = arith.constant 0 : index
    %c0_3 = arith.constant 0 : index
    %5 = vector.load %arg3[%c0_2, %c0_3] : memref<4x128xf32, #tpu.memory_space<vmem>>, vector<4x128xf32>
    tpu.vector_store %arg3[%c0_2, %c0_3], %4 {strides = array<i32>} : memref<4x128xf32, #tpu.memory_space<vmem>>, vector<4x128xf32>,
    return
  }
  func.func @transform_0(%arg0: i32) -> i32 {
    %c0_i32 = arith.constant 0 : i32
    %c0_i32_0 = arith.constant 0 : i32
    return %c0_i32 : i32
  }
  func.func @transform_1(%arg0: i32) -> (i32, i32) {
    %c0_i32 = arith.constant 0 : i32
    %c0_i32_0 = arith.constant 0 : i32
    return %arg0, %c0_i32 : i32, i32
  }
  func.func @transform_2(%arg0: i32) -> (i32, i32) {
    %c0_i32 = arith.constant 0 : i32
    %c0_i32_0 = arith.constant 0 : i32
    return %arg0, %c0_i32 : i32, i32
  }
}

</mosaic_0001>

<llo_original>
// kernel: tpu_custom_call.1
$region0: #{tpu_custom_call.1}
  #allocation0 [shape = 'u32[]', space=smem, size = 0x4, offset = 0x4, fixed_abs, tag = 'smem constant byte address 0x4 - core index']
  #allocation1 [shape = 'u32[144,128]{1,0:T(1,128)}', space=vmem, size = 0x12000, scoped, tag = 'internal scratch']
  #allocation2 [shape = 'f32[1]{0:T(128)S(6)}', space=smem, size = 0x200, scoped, tag = 'scoped memory for tpu_custom_call.1']
  %s0 = inlined_call_operand.<no memory space> [shape: f32[1], index: 0, kind: input, shape index: {}]
  %s1 = inlined_call_operand.hbm [shape: f32[4,128], index: 1, kind: input, shape index: {}]
  %s2 = inlined_call_operand.hbm [shape: f32[4,128], index: 2, kind: output, shape index: {}]
  %s3 = sld [smem:[#allocation0]]
  $region22: #{tpu_custom_call.1} parent=0
    _
  %s5 = ssub.s32 1, %s3
  %s6 = scalar_select 0, %s5, %s3
  %7 = sst [smem:[#allocation2]] %s0
  $region1: #{tpu_custom_call.1} parent=0
    #allocation3 [shape = 'u8[2048]{0}', space=vmem, size = 0x800, scoped, tag = 'input window, operand 1, single buffered']
    #allocation4 [shape = 's32[1]{0}', space=sflag, size = 0x4, scoped, tag = 'scoped memory for tpu_custom_call.1']
    #allocation5 [shape = 's32[1]{0}', space=sflag, size = 0x4, scoped, tag = 'scoped memory for tpu_custom_call.1']
    #allocation6 [shape = 'u8[2048]{0}', space=vmem, size = 0x800, scoped, tag = 'output window, operand 0, single buffered']
    %8 = vsyncpa [#allocation4], 0
    %9 = vsyncpa [#allocation5], 0
    // Predicated region
    $region2: #{tpu_custom_call.1} parent=1 // pred_check
      _
    $region3: #{tpu_custom_call.1} parent=1 // pred_check_branch
      %11 = sbr.rel (0) target = $region5
    $region4: #{tpu_custom_call.1} parent=1 // pred_region
      _
    $region5: #{tpu_custom_call.1} parent=1 // pred_fallthru
      _
    // Predicated region
    $region6: #{tpu_custom_call.1} parent=1 // pred_check
      _
    $region7: #{tpu_custom_call.1} parent=1 // pred_check_branch
      %13 = sbr.rel (0) target = $region9
    $region8: #{tpu_custom_call.1} parent=1 // pred_region
      %s15 = ssub.s32 64, 64
      %16 = vsyncadd [#allocation4], %s15
      %s18 = sshll.u32 [#allocation3], 4
      %s19 = int_to_ptr.vmem [resolvable:$true] %s18
      %21 = dma.hbm_to_vmem [thread:$0]  %s1, 64, %s19, [#allocation4]
    $region9: #{tpu_custom_call.1} parent=1 // pred_fallthru
      _
    // Predicated region
    $region10: #{tpu_custom_call.1} parent=1 // pred_check
      _
    $region11: #{tpu_custom_call.1} parent=1 // pred_check_branch
      %23 = sbr.rel (0) target = $region13
    $region12: #{tpu_custom_call.1} parent=1 // pred_region
      %24 = dma.done [#allocation4], 64
    $region13: #{tpu_custom_call.1} parent=1 // pred_fallthru
      _
    %s25 = sld [smem:[#allocation2]]
    %v26 = vld [vmem:[#allocation3] sm:$0xf]
    %v27 = vtanh.pop %v26
    %v28 = vstv %s25
    %v29 = vmul.f32 %v27, %v28
    %30 = vst [vmem:[#allocation6] sm:$0xf] %v29
    // Predicated region
    $region14: #{tpu_custom_call.1} parent=1 // pred_check
      _
    $region15: #{tpu_custom_call.1} parent=1 // pred_check_branch
      %32 = sbr.rel (0) target = $region17
    $region16: #{tpu_custom_call.1} parent=1 // pred_region
      %s34 = ssub.s32 64, 64
      %35 = vsyncadd [#allocation5], %s34
      %s37 = sshll.u32 [#allocation6], 4
      %s38 = int_to_ptr.vmem [resolvable:$true] %s37
      %40 = dma.vmem_to_hbm [thread:$0]  %s38, 64, %s2, [#allocation5]
    $region17: #{tpu_custom_call.1} parent=1 // pred_fallthru
      _
    // Predicated region
    $region18: #{tpu_custom_call.1} parent=1 // pred_check
      _
    $region19: #{tpu_custom_call.1} parent=1 // pred_check_branch
      %42 = sbr.rel (0) target = $region21
    $region20: #{tpu_custom_call.1} parent=1 // pred_region
      %43 = dma.done [#allocation5], 64
    $region21: #{tpu_custom_call.1} parent=1 // pred_fallthru
      _
    %44 = vsyncpa [#allocation4], 1
    %45 = vsyncpa [#allocation5], 1

</llo_original>
